<compile_context>
chip_gen: v7x
topology: tpu7x:2x2x1
jax: 0.10.0
libtpu: 0.0.40
codegen_flags: <defaults>
</compile_context>

<pallas_src>
import functools

import jax
import jax.numpy as jnp
from jax.experimental import pallas as pl
from jax.experimental.pallas import tpu as pltpu


def _rmsnorm_kernel(x_ref, w_ref, o_ref, *, eps, inv_h):
    # x_ref: (TM, H) block of activations in their original dtype
    # w_ref: (1, H) float32 weight, resident across the whole grid
    x_in = x_ref[...]
    x = x_in.astype(jnp.float32)
    # sum (XLU) * compile-time 1/H constant instead of jnp.mean (skips a
    # full-width VPU divide); rsqrt goes to the EUP slot.
    variance = jnp.sum(x * x, axis=-1, keepdims=True) * inv_h
    hs = (x * jax.lax.rsqrt(variance + eps)).astype(x_in.dtype)  # torch: .to(input_dtype)
    # f32 weight * input-dtype hs -> promoted to f32 (torch promotion), then
    # cast to the requested output dtype.
    o_ref[...] = (w_ref[...] * hs).astype(o_ref.dtype)


def _round_up(x, m):
    return ((x + m - 1) // m) * m


def _round_down(x, m):
    return (x // m) * m


def llama_rms_norm(hidden_states, weight, eps=1e-6, out_dtype=None,
                   target_step_bytes=4 << 20):
    """hidden_states: (..., H); weight: (H,) float32.

    out_dtype: None -> torch-exact promotion (f32 output for bf16 input with a
               f32 weight). Pass hidden_states.dtype to halve HBM write traffic
               (one extra rounding step vs torch).
    target_step_bytes: per-grid-step in+out tile byte target used to size the
               row tile (keeps the kernel on the flat part of the HBM roofline
               while amortizing the ~600-cycle per-step overhead).
    """
    orig_shape = hidden_states.shape
    H = orig_shape[-1]
    x2d = hidden_states.reshape(-1, H)
    rows = x2d.shape[0]

    if out_dtype is None:
        out_dtype = jnp.promote_types(weight.dtype, hidden_states.dtype)
    w2d = weight.reshape(1, H)

    in_item = jnp.dtype(x2d.dtype).itemsize
    out_item = jnp.dtype(out_dtype).itemsize
    w_bytes = H * jnp.dtype(weight.dtype).itemsize

    # Native sublane multiple for the input dtype (bf16 packs 16 rows/vreg).
    sublane = {4: 8, 2: 16, 1: 32}.get(in_item, 8)

    # Generation-aware VMEM cap: ~80% of physical VMEM (leaves headroom for
    # Mosaic internal scratch / semaphores / pipeline bookkeeping).
    try:
        vmem_cap = int(pltpu.get_tpu_info().vmem_capacity_bytes)
    except Exception:
        vmem_cap = 64 << 20  # conservative fallback (v7x-sized)
    budget_cap = int(vmem_cap * 0.8)

    # Per-row VMEM footprint: double-buffered in + out tiles plus ~3 live
    # (tm, H) f32 intermediates of the elementwise chain.
    per_row_vmem = H * (2 * in_item + 2 * out_item + 3 * 4)
    misc_vmem = 2 * w_bytes + (2 << 20)  # resident weight + headroom
    tm_vmem_max = max(sublane,
                      _round_down(max(budget_cap - misc_vmem, 0) // per_row_vmem,
                                  sublane))

    # Row tile from the per-step byte target (in + out HBM traffic per step).
    tm = target_step_bytes // (H * (in_item + out_item))
    tm = max(sublane, _round_down(tm, sublane))
    tm = min(tm, tm_vmem_max)
    # Never bigger than the (sublane-rounded) problem.
    tm = min(tm, _round_up(rows, sublane))
    # Keep >=2 grid steps when rows allow, so both v7x TensorCores get work.
    if rows >= 2 * sublane:
        tm = min(tm, _round_up(-(-rows // 2), sublane))
    tm = max(tm, sublane)

    vmem_limit = int(min(budget_cap, max(per_row_vmem * tm + misc_vmem, 32 << 20)))

    grid = (pl.cdiv(rows, tm),)  # partial last block handled by Pallas masking

    out = pl.pallas_call(
        functools.partial(_rmsnorm_kernel, eps=eps, inv_h=1.0 / H),
        out_shape=jax.ShapeDtypeStruct((rows, H), out_dtype),
        grid_spec=pltpu.PrefetchScalarGridSpec(
            num_scalar_prefetch=0,
            grid=grid,
            in_specs=[
                pl.BlockSpec((tm, H), lambda i: (i, 0)),
                pl.BlockSpec((1, H), lambda i: (0, 0)),
            ],
            out_specs=pl.BlockSpec((tm, H), lambda i: (i, 0)),
        ),
        compiler_params=pltpu.CompilerParams(
            dimension_semantics=("parallel",),  # shards grid across TCs (v7x)
            vmem_limit_bytes=vmem_limit,
        ),
    )(x2d, w2d)

    return out.reshape(orig_shape[:-1] + (H,))


def llama_rms_norm_ref(hidden_states, weight, eps=1e-6):
    """Pure-JAX reference mirroring the PyTorch forward."""
    input_dtype = hidden_states.dtype
    x = hidden_states.astype(jnp.float32)
    variance = jnp.mean(x * x, axis=-1, keepdims=True)
    x = x * jax.lax.rsqrt(variance + eps)
    return weight * x.astype(input_dtype)


if __name__ == "__main__":
    key = jax.random.PRNGKey(0)

    # Small, deterministic test shapes.
    batch, seq, hidden = 2, 8, 32
    x = jax.random.normal(key, (batch, seq, hidden), dtype=jnp.float32).astype(
        jnp.bfloat16
    )
    # nn.Parameter(torch.ones(hidden_size)) -> float32 ones
    weight = jnp.ones((hidden,), dtype=jnp.float32)

    # 1) torch-exact promotion path
    out = jax.block_until_ready(llama_rms_norm(x, weight, eps=1e-6))
    ref = llama_rms_norm_ref(x, weight, eps=1e-6)
    assert out.shape == ref.shape, (out.shape, ref.shape)
    assert out.dtype == ref.dtype, (out.dtype, ref.dtype)
    assert jnp.allclose(out, ref, atol=1e-5, rtol=1e-5), "mismatch vs reference"

    # 2) row count not divisible by the sublane tile -> exercises the masked
    #    partial last block (no host-side pad/slice anymore).
    x2 = jax.random.normal(
        jax.random.PRNGKey(1), (3, 5, hidden), dtype=jnp.float32
    ).astype(jnp.bfloat16)
    out2 = jax.block_until_ready(llama_rms_norm(x2, weight, eps=1e-6))
    ref2 = llama_rms_norm_ref(x2, weight, eps=1e-6)
    assert out2.shape == ref2.shape and out2.dtype == ref2.dtype
    assert jnp.allclose(out2, ref2, atol=1e-5, rtol=1e-5), "mismatch (partial tile)"

    # 3) bf16-output fast path (recommended when the consumer accepts it):
    #    halves HBM write traffic; differs from torch by one bf16 rounding.
    out3 = jax.block_until_ready(
        llama_rms_norm(x, weight, eps=1e-6, out_dtype=x.dtype)
    )
    assert out3.dtype == x.dtype
    assert jnp.allclose(out3.astype(jnp.float32), ref, atol=2e-2, rtol=2e-2), \
        "mismatch (bf16 out)"

    print("KERNEL_OK")
</pallas_src>

<mosaic_0001>
module attributes {stable_mosaic.version = 11 : i64} {
  func.func @_rmsnorm_kernel(%arg0: i32, %arg1: memref<16x32xbf16, #tpu.memory_space<vmem>>, %arg2: memref<1x32xf32, #tpu.memory_space<vmem>>, %arg3: memref<16x32xf32, #tpu.memory_space<vmem>>) attributes {dimension_semantics = [#tpu.dimension_semantics<parallel>], iteration_bounds = array<i64: 1>, scalar_prefetch = 0 : i64, scratch_operands = 0 : i64, tpu.core_type = #tpu.core_type<tc>, window_params = [{transform_indices = @transform_0, window_bounds = array<i64: 16, 32>}, {pipeline_mode = #tpu.pipeline_mode<synchronous>, transform_indices = @transform_1, window_bounds = array<i64: 1, 32>}, {transform_indices = @transform_2, window_bounds = array<i64: 16, 32>}]} {
    %c0 = arith.constant 0 : index
    %c0_0 = arith.constant 0 : index
    %0 = vector.load %arg1[%c0, %c0_0] : memref<16x32xbf16, #tpu.memory_space<vmem>>, vector<16x32xbf16>
    %1 = arith.extf %0 : vector<16x32xbf16> to vector<16x32xf32>
    %2 = arith.mulf %1, %1 : vector<16x32xf32>
    %cst = arith.constant dense<0.000000e+00> : vector<16xf32>
    %3 = vector.multi_reduction <add>, %2, %cst [1] : vector<16x32xf32> to vector<16xf32>
    %4 = vector.shape_cast %3 : vector<16xf32> to vector<16x1xf32>
    %cst_1 = arith.constant 3.125000e-02 : f32
    %5 = vector.broadcast %cst_1 : f32 to vector<16x1xf32>
    %6 = arith.mulf %4, %5 : vector<16x1xf32>
    %cst_2 = arith.constant 9.99999997E-7 : f32
    %7 = vector.broadcast %cst_2 : f32 to vector<16x1xf32>
    %8 = arith.addf %6, %7 : vector<16x1xf32>
    %9 = math.rsqrt %8 : vector<16x1xf32>
    %10 = vector.broadcast %9 : vector<16x1xf32> to vector<16x32xf32>
    %11 = arith.mulf %1, %10 : vector<16x32xf32>
    %12 = arith.truncf %11 : vector<16x32xf32> to vector<16x32xbf16>
    %c0_3 = arith.constant 0 : index
    %c0_4 = arith.constant 0 : index
    %13 = vector.load %arg2[%c0_3, %c0_4] : memref<1x32xf32, #tpu.memory_space<vmem>>, vector<1x32xf32>
    %14 = arith.extf %12 : vector<16x32xbf16> to vector<16x32xf32>
    %15 = vector.broadcast %13 : vector<1x32xf32> to vector<16x32xf32>
    %16 = arith.mulf %15, %14 : vector<16x32xf32>
    %c0_5 = arith.constant 0 : index
    %c0_6 = arith.constant 0 : index
    %17 = vector.load %arg3[%c0_5, %c0_6] : memref<16x32xf32, #tpu.memory_space<vmem>>, vector<16x32xf32>
    tpu.vector_store %arg3[%c0_5, %c0_6], %16 {strides = array<i32>} : memref<16x32xf32, #tpu.memory_space<vmem>>, vector<16x32xf32>,
    return
  }
  func.func @transform_0(%arg0: i32) -> (i32, i32) {
    %c0_i32 = arith.constant 0 : i32
    %c0_i32_0 = arith.constant 0 : i32
    return %arg0, %c0_i32 : i32, i32
  }
  func.func @transform_1(%arg0: i32) -> (i32, i32) {
    %c0_i32 = arith.constant 0 : i32
    %c0_i32_0 = arith.constant 0 : i32
    %c0_i32_1 = arith.constant 0 : i32
    return %c0_i32, %c0_i32_0 : i32, i32
  }
  func.func @transform_2(%arg0: i32) -> (i32, i32) {
    %c0_i32 = arith.constant 0 : i32
    %c0_i32_0 = arith.constant 0 : i32
    return %arg0, %c0_i32 : i32, i32
  }
}

</mosaic_0001>

<llo_original>
// kernel: tpu_custom_call.1
$region0: #{tpu_custom_call.1}
  #allocation0 [shape = 'u32[]', space=smem, size = 0x4, offset = 0x4, fixed_abs, tag = 'smem constant byte address 0x4 - core index']
  #allocation1 [shape = 'u32[144,128]{1,0:T(1,128)}', space=vmem, size = 0x12000, scoped, tag = 'internal scratch']
  %s0 = inlined_call_operand.hbm [shape: bf16[16,32], index: 0, kind: input, shape index: {}]
  %s1 = inlined_call_operand.vmem [shape: f32[1,32], index: 1, kind: input, shape index: {}]
  %s2 = inlined_call_operand.hbm [shape: f32[16,32], index: 2, kind: output, shape index: {}]
  %s3 = sld [smem:[#allocation0]]
  $region22: #{tpu_custom_call.1} parent=0
    _
  %s5 = ssub.s32 1, %s3
  %s6 = scalar_select 0, %s5, %s3
  $region1: #{tpu_custom_call.1} parent=0
    #allocation2 [shape = 'u8[4096]{0}', space=vmem, size = 0x1000, scoped, tag = 'input window, operand 0, single buffered']
    #allocation3 [shape = 's32[1]{0}', space=sflag, size = 0x4, scoped, tag = 'scoped memory for tpu_custom_call.1']
    #allocation4 [shape = 's32[1]{0}', space=sflag, size = 0x4, scoped, tag = 'scoped memory for tpu_custom_call.1']
    #allocation5 [shape = 'u8[8192]{0}', space=vmem, size = 0x2000, scoped, tag = 'output window, operand 0, single buffered']
    %7 = vsyncpa [#allocation3], 0
    %8 = vsyncpa [#allocation4], 0
    // Predicated region
    $region2: #{tpu_custom_call.1} parent=1 // pred_check
      _
    $region3: #{tpu_custom_call.1} parent=1 // pred_check_branch
      %10 = sbr.rel (0) target = $region5
    $region4: #{tpu_custom_call.1} parent=1 // pred_region
      %s12 = ssub.s32 128, 128
      %13 = vsyncadd [#allocation3], %s12
      %s14 = sshll.u32 [#allocation2], 4
      %s15 = int_to_ptr.vmem [resolvable:$true] %s14
      %20 = dma.hbm_to_vmem [thread:$0]  %s0, 128, %s15, [#allocation3], 64, 64, 4
    $region5: #{tpu_custom_call.1} parent=1 // pred_fallthru
      _
    // Predicated region
    $region6: #{tpu_custom_call.1} parent=1 // pred_check
      _
    $region7: #{tpu_custom_call.1} parent=1 // pred_check_branch
      %22 = sbr.rel (0) target = $region9
    $region8: #{tpu_custom_call.1} parent=1 // pred_region
      _
    $region9: #{tpu_custom_call.1} parent=1 // pred_fallthru
      _
    // Predicated region
    $region10: #{tpu_custom_call.1} parent=1 // pred_check
      _
    $region11: #{tpu_custom_call.1} parent=1 // pred_check_branch
      %24 = sbr.rel (0) target = $region13
    $region12: #{tpu_custom_call.1} parent=1 // pred_region
      %25 = dma.done [#allocation3], 128
    $region13: #{tpu_custom_call.1} parent=1 // pred_fallthru
      _
    %v26 = vld [vmem:[#allocation2] sm:$0xf]
    %v27 = vld [vmem:[#allocation2 + $0x4] sm:$0xf]
    %v28 = vunpack.c.l.bf16 %v26
    %v29 = vunpack.c.l.bf16 %v27
    %v30 = vmul.f32 %v28, %v28
    %v31 = vmul.f32 %v29, %v29
    %vm32 = vcmask 261120
    %v33 = vsel %vm32, %v30, 0.0
    %34 = vadd.xlane.f32.xlu0 %v33
    %v35 = vpop.xlane.xlu0 %34
    %v36 = vsel %vm32, %v31, 0.0
    %37 = vadd.xlane.f32.xlu0 %v36
    %v38 = vpop.xlane.xlu0 %37
    %v39 = vmul.f32 %v35, 0.03125
    %v40 = vmul.f32 %v38, 0.03125
    %v41 = vadd.f32 %v39, 1e-06
    %v42 = vadd.f32 %v40, 1e-06
    %v43 = vrsqrt.pop %v41
    %v44 = vrsqrt.pop %v42
    %v45 = vmul.f32 %v28, %v43
    %v46 = vmul.f32 %v29, %v44
    %v47 = vpack.c.bf16 %v46, %v45
    %v48 = vld [vmem:[%s1] sm:$0x1]
    %v49 = vunpack.c.l.bf16 %v47
    %v50 = vunpack.c.h.bf16 %v47
    %v52 = vlaneseq
    %v53 = vshrl.u32 %v52, 7
    %v54 = vsub.s32 0, %v53
    %v55 = vrot.slane %v48, %v54
    %v57 = vmul.f32 %v55, %v49
    %v58 = vmul.f32 %v55, %v50
    %59 = vst.msk [vmem:[#allocation5] sm:$0xff] %vm32, %v57
    %60 = vst.msk [vmem:[#allocation5 + $0x8] sm:$0xff] %vm32, %v58
    // Predicated region
    $region14: #{tpu_custom_call.1} parent=1 // pred_check
      _
    $region15: #{tpu_custom_call.1} parent=1 // pred_check_branch
      %62 = sbr.rel (0) target = $region17
    $region16: #{tpu_custom_call.1} parent=1 // pred_region
      %s64 = ssub.s32 256, 256
      %65 = vsyncadd [#allocation4], %s64
      %s66 = sshll.u32 [#allocation5], 4
      %s67 = int_to_ptr.vmem [resolvable:$true] %s66
      %72 = dma.vmem_to_hbm [thread:$0]  %s67, 256, %s2, [#allocation4], 128, 128, 8
    $region17: #{tpu_custom_call.1} parent=1 // pred_fallthru
      _
    // Predicated region
    $region18: #{tpu_custom_call.1} parent=1 // pred_check
      _
    $region19: #{tpu_custom_call.1} parent=1 // pred_check_branch
      %74 = sbr.rel (0) target = $region21
    $region20: #{tpu_custom_call.1} parent=1 // pred_region
      %75 = dma.done [#allocation4], 256
    $region21: #{tpu_custom_call.1} parent=1 // pred_fallthru
      _
    %76 = vsyncpa [#allocation3], 1
    %77 = vsyncpa [#allocation4], 1

</llo_original>
